<compile_context>
chip_gen: v7x
topology: tpu7x:2x2x1
jax: 0.10.0
libtpu: 0.0.40
codegen_flags: <defaults>
</compile_context>

<pallas_src>
import functools
import math

import jax
import jax.numpy as jnp
from jax.experimental import pallas as pl
from jax.experimental.pallas import tpu as pltpu

LN_EPS = 1e-5                    # torch.nn.LayerNorm default
NEG_INF = -1e30                  # key-padding mask bias
VMEM_LIMIT = 48 * 1024 * 1024    # <= v7x 64 MiB physical VMEM with headroom
POSE_FEATS = 420                 # InputAttendProcess / OutputProcess feature dim
POSE_FEATS_PAD = 512             # lane-dense padding of the 420-wide projections


# ----------------------------------------------------------------------------
# small helpers
# ----------------------------------------------------------------------------
def _round_up(x, m):
    return ((x + m - 1) // m) * m


def _row_tile(m):
    """Row tile: multiple of 16 (bf16-safe), up to 512 for big row counts."""
    m8 = _round_up(m, 8)
    if m8 >= 1024:
        return 512
    if m8 >= 512:
        return 256
    if m8 >= 32:
        return _round_up(m8 // 2, 16)
    return m8                      # tiny: single full-extent block


def _pad_rows(x, mp):
    if x.shape[0] == mp:
        return x
    return jnp.pad(x, ((0, mp - x.shape[0]),) + ((0, 0),) * (x.ndim - 1))


def _erf(z):
    # Abramowitz & Stegun 7.1.26 (|err| < 1.5e-7); only uses exp, lowers in
    # Mosaic.  Used for the exact (erf-based) GELU of activation='gelu'.
    # (A tanh-based GELU would move work to the EUP on v6e/v7x but changes
    #  numerics vs torch's exact GELU, so it is intentionally not used.)
    a1, a2, a3, a4, a5 = (0.254829592, -0.284496736, 1.421413741,
                          -1.453152027, 1.061405429)
    p = 0.3275911
    sgn = jnp.where(z >= 0.0, 1.0, -1.0)
    az = jnp.abs(z)
    t = 1.0 / (1.0 + p * az)
    poly = ((((a5 * t + a4) * t + a3) * t + a2) * t + a1) * t
    return sgn * (1.0 - poly * jnp.exp(-az * az))


def _gelu(y):
    return 0.5 * y * (1.0 + _erf(y * (1.0 / math.sqrt(2.0))))


def _layernorm(y, g, b):
    mu = jnp.mean(y, axis=-1, keepdims=True)
    yc = y - mu
    var = jnp.mean(yc * yc, axis=-1, keepdims=True)
    return yc * jax.lax.rsqrt(var + LN_EPS) * g + b


# ----------------------------------------------------------------------------
# Pallas kernels
# ----------------------------------------------------------------------------
def _linear_kernel(x_ref, w_ref, b_ref, o_ref):
    # f32 activation tile cast to bf16 in VMEM (no wrapper-side cast pass).
    y = jnp.dot(x_ref[...].astype(jnp.bfloat16), w_ref[...],
                preferred_element_type=jnp.float32) + b_ref[...]
    o_ref[...] = y.astype(o_ref.dtype)


def pallas_linear(x, w, b, *, out_dtype=jnp.float32):
    """x: [M, K] f32, w: [K, N] bf16 (== torch weight.T, VMEM-resident), b: [N]."""
    M, K = x.shape
    N = w.shape[1]
    tm = _row_tile(M)
    mp = _round_up(M, tm)
    out = pl.pallas_call(
        _linear_kernel,
        out_shape=jax.ShapeDtypeStruct((mp, N), out_dtype),
        grid=(mp // tm,),
        in_specs=[pl.BlockSpec((tm, K), lambda i: (i, 0)),
                  pl.BlockSpec((K, N), lambda i: (0, 0)),     # resident weight
                  pl.BlockSpec((1, N), lambda i: (0, 0))],
        out_specs=pl.BlockSpec((tm, N), lambda i: (i, 0)),
        compiler_params=pltpu.CompilerParams(
            dimension_semantics=("parallel",),
            vmem_limit_bytes=VMEM_LIMIT),
    )(_pad_rows(x, mp), w.astype(jnp.bfloat16),
      b.reshape(1, N).astype(jnp.float32))
    return out[:M]


def _ffn_kernel(x_ref, w1_ref, b1_ref, w2_ref, b2_ref, g_ref, bt_ref, o_ref):
    x = x_ref[...]                                               # [tm, D] f32
    h = jnp.dot(x.astype(jnp.bfloat16), w1_ref[...],
                preferred_element_type=jnp.float32)              # [tm, FF]
    h = _gelu(h + b1_ref[...])
    y = jnp.dot(h.astype(jnp.bfloat16), w2_ref[...],
                preferred_element_type=jnp.float32)
    y = y + b2_ref[...] + x                                      # residual add
    o_ref[...] = _layernorm(y, g_ref[...], bt_ref[...]).astype(o_ref.dtype)


def pallas_ffn(x, w1, b1, w2, b2, g, bt):
    """Fused FFN + residual + LayerNorm with VMEM-resident w1/w2.
    x: [M, D] f32 residual stream."""
    M, D = x.shape
    FF = w1.shape[1]
    tm = _row_tile(M)
    mp = _round_up(M, tm)
    out = pl.pallas_call(
        _ffn_kernel,
        out_shape=jax.ShapeDtypeStruct((mp, D), jnp.float32),
        grid=(mp // tm,),
        in_specs=[pl.BlockSpec((tm, D), lambda i: (i, 0)),
                  pl.BlockSpec((D, FF), lambda i: (0, 0)),       # resident w1
                  pl.BlockSpec((1, FF), lambda i: (0, 0)),
                  pl.BlockSpec((FF, D), lambda i: (0, 0)),       # resident w2
                  pl.BlockSpec((1, D), lambda i: (0, 0)),
                  pl.BlockSpec((1, D), lambda i: (0, 0)),
                  pl.BlockSpec((1, D), lambda i: (0, 0))],
        out_specs=pl.BlockSpec((tm, D), lambda i: (i, 0)),
        compiler_params=pltpu.CompilerParams(
            dimension_semantics=("parallel",),
            vmem_limit_bytes=VMEM_LIMIT),
    )(_pad_rows(x, mp), w1.astype(jnp.bfloat16),
      b1.reshape(1, FF).astype(jnp.float32), w2.astype(jnp.bfloat16),
      b2.reshape(1, D).astype(jnp.float32),
      g.reshape(1, D).astype(jnp.float32), bt.reshape(1, D).astype(jnp.float32))
    return out[:M]


def _outproj_ln_kernel(a_ref, w_ref, b_ref, r_ref, g_ref, bt_ref, o_ref):
    y = jnp.dot(a_ref[...], w_ref[...], preferred_element_type=jnp.float32)
    y = y + b_ref[...] + r_ref[...]                              # residual add
    o_ref[...] = _layernorm(y, g_ref[...], bt_ref[...]).astype(o_ref.dtype)


def pallas_outproj_ln(attn, w, b, resid, g, bt):
    """Fused MHA out-proj + residual + LayerNorm.  attn bf16, resid f32."""
    M, D = attn.shape
    tm = _row_tile(M)
    mp = _round_up(M, tm)
    out = pl.pallas_call(
        _outproj_ln_kernel,
        out_shape=jax.ShapeDtypeStruct((mp, D), jnp.float32),
        grid=(mp // tm,),
        in_specs=[pl.BlockSpec((tm, D), lambda i: (i, 0)),
                  pl.BlockSpec((D, D), lambda i: (0, 0)),        # resident w_o
                  pl.BlockSpec((1, D), lambda i: (0, 0)),
                  pl.BlockSpec((tm, D), lambda i: (i, 0)),
                  pl.BlockSpec((1, D), lambda i: (0, 0)),
                  pl.BlockSpec((1, D), lambda i: (0, 0))],
        out_specs=pl.BlockSpec((tm, D), lambda i: (i, 0)),
        compiler_params=pltpu.CompilerParams(
            dimension_semantics=("parallel",),
            vmem_limit_bytes=VMEM_LIMIT),
    )(_pad_rows(attn, mp), w.astype(jnp.bfloat16),
      b.reshape(1, D).astype(jnp.float32), _pad_rows(resid, mp),
      g.reshape(1, D).astype(jnp.float32), bt.reshape(1, D).astype(jnp.float32))
    return out[:M]


def _attention_kernel(q_ref, k_ref, v_ref, m_ref, o_ref):
    # One (batch, head) per grid step.  1/sqrt(dh) is folded into w_in's Q part.
    q = q_ref[0]                                                 # [S, dh] bf16
    k = k_ref[0]
    v = v_ref[0]
    bias = m_ref[0]                                              # [1, S] f32
    s = jax.lax.dot_general(q, k, dimension_numbers=(((1,), (1,)), ((), ())),
                            preferred_element_type=jnp.float32)  # [S, S]
    s = s + bias
    s = s - jnp.max(s, axis=-1, keepdims=True)
    p = jnp.exp(s)
    p = p * pl.reciprocal(jnp.sum(p, axis=-1, keepdims=True), approx=True)
    o_ref[0] = jnp.dot(p.astype(jnp.bfloat16), v,
                       preferred_element_type=jnp.float32).astype(o_ref.dtype)


def pallas_attention(qkv, mask_bias, num_heads):
    """qkv: [B, S, 3D] bf16 (in_proj output), mask_bias: [B, 1, S] f32."""
    B, S, three_d = qkv.shape
    D = three_d // 3
    dh = D // num_heads
    assert dh % 128 == 0, (
        "pallas_attention requires head_dim % 128 == 0 (real model: D=1024, H=8)")
    q_spec = pl.BlockSpec((1, S, dh), lambda b, h: (b, 0, h))
    k_spec = pl.BlockSpec((1, S, dh), lambda b, h: (b, 0, num_heads + h))
    v_spec = pl.BlockSpec((1, S, dh), lambda b, h: (b, 0, 2 * num_heads + h))
    return pl.pallas_call(
        _attention_kernel,
        out_shape=jax.ShapeDtypeStruct((B, S, D), jnp.bfloat16),
        grid=(B, num_heads),
        in_specs=[q_spec, k_spec, v_spec,
                  pl.BlockSpec((1, 1, S), lambda b, h: (b, 0, 0))],
        out_specs=pl.BlockSpec((1, S, dh), lambda b, h: (b, 0, h)),
        compiler_params=pltpu.CompilerParams(
            dimension_semantics=("parallel", "parallel"),
            vmem_limit_bytes=VMEM_LIMIT),
    )(qkv, qkv, qkv, mask_bias)


def _cond_embed_kernel(t_ref, txt_ref, w1_ref, b1_ref, w2_ref, b2_ref,
                       wt_ref, bt_ref, o_ref):
    # Fused TimestepEmbedder (lin -> SiLU -> lin) + embed_text, all tiny.
    h = jnp.dot(t_ref[...].astype(jnp.bfloat16), w1_ref[...],
                preferred_element_type=jnp.float32) + b1_ref[...]
    h = h * (1.0 / (1.0 + jnp.exp(-h)))                          # SiLU
    emb = jnp.dot(h.astype(jnp.bfloat16), w2_ref[...],
                  preferred_element_type=jnp.float32) + b2_ref[...]
    emb = emb + jnp.dot(txt_ref[...].astype(jnp.bfloat16), wt_ref[...],
                        preferred_element_type=jnp.float32) + bt_ref[...]
    o_ref[...] = emb


def pallas_cond_embed(t_in, txt, p):
    """t_in: [bs, D] f32 (pe[timesteps]), txt: [bs, clip_dim] f32 -> [bs, D]."""
    bs, D = t_in.shape
    clip_dim = txt.shape[1]
    mp = _round_up(bs, 8)
    out = pl.pallas_call(
        _cond_embed_kernel,
        out_shape=jax.ShapeDtypeStruct((mp, D), jnp.float32),
        grid=(1,),
        in_specs=[pl.BlockSpec((mp, D), lambda i: (0, 0)),
                  pl.BlockSpec((mp, clip_dim), lambda i: (0, 0)),
                  pl.BlockSpec((D, D), lambda i: (0, 0)),
                  pl.BlockSpec((1, D), lambda i: (0, 0)),
                  pl.BlockSpec((D, D), lambda i: (0, 0)),
                  pl.BlockSpec((1, D), lambda i: (0, 0)),
                  pl.BlockSpec((clip_dim, D), lambda i: (0, 0)),
                  pl.BlockSpec((1, D), lambda i: (0, 0))],
        out_specs=pl.BlockSpec((mp, D), lambda i: (0, 0)),
        compiler_params=pltpu.CompilerParams(
            dimension_semantics=("arbitrary",),
            vmem_limit_bytes=VMEM_LIMIT),
    )(_pad_rows(t_in, mp), _pad_rows(txt, mp),
      p["te_w1"], p["te_b1"].reshape(1, D).astype(jnp.float32),
      p["te_w2"], p["te_b2"].reshape(1, D).astype(jnp.float32),
      p["et_w"], p["et_b"].reshape(1, D).astype(jnp.float32))
    return out[:bs]


# ----------------------------------------------------------------------------
# Transformer encoder layer (post-norm, gelu, eval mode)
# ----------------------------------------------------------------------------
def transformer_encoder_layer(x, mask_bias, lp, num_heads):
    B, S, D = x.shape
    x2d = x.reshape(B * S, D)
    # QKV in_proj (bf16 output, already in the batch-major attention layout)
    qkv = pallas_linear(x2d, lp["w_in"], lp["b_in"],
                        out_dtype=jnp.bfloat16).reshape(B, S, 3 * D)
    attn = pallas_attention(qkv, mask_bias, num_heads)           # [B, S, D] bf16
    x2d = pallas_outproj_ln(attn.reshape(B * S, D), lp["w_o"], lp["b_o"],
                            x2d, lp["ln1_g"], lp["ln1_b"])       # f32
    x2d = pallas_ffn(x2d, lp["w_ff1"], lp["b_ff1"], lp["w_ff2"], lp["b_ff2"],
                     lp["ln2_g"], lp["ln2_b"])                   # f32
    return x2d.reshape(B, S, D)


# ----------------------------------------------------------------------------
# InputAttendProcess / OutputProcess rearrangements (pure indexing, XLA glue)
# ----------------------------------------------------------------------------
def input_attend_rearrange(x):
    """x: [b, 263, 1, T] -> [b, T, 420]  (tokens in (j t) order, batch-major)."""
    b, _, _, T = x.shape
    m = x[:, :, 0, :]                                            # [b, 263, T]
    root = m[:, :4]
    pos = m[:, 4:67].reshape(b, 21, 3, T)
    rot = m[:, 67:193].reshape(b, 21, 6, T)
    vel = m[:, 193:259].reshape(b, 22, 3, T)
    foot = m[:, 259:263]
    movement = jnp.concatenate([pos, rot], axis=2)               # [b,21,9,T]
    movement = jnp.pad(movement, ((0, 0), (0, 1), (0, 0), (0, 0)))
    motion = jnp.concatenate([movement, vel], axis=2)            # [b,22,12,T]
    feat = 12
    ext = jnp.concatenate([
        jnp.pad(root, ((0, 0), (0, 8), (0, 0)))[:, None],
        motion,
        jnp.pad(foot[:, :2], ((0, 0), (0, feat - 2), (0, 0)))[:, None],
        jnp.pad(foot[:, 2:], ((0, 0), (0, feat - 2), (0, 0)))[:, None],
    ], axis=1)                                                    # [b,25,12,T]
    spine = ext[:, :7]
    lhand = ext[:, 7:11]
    rhand = ext[:, 11:15]
    lfoot = jnp.concatenate([ext[:, 15:19], ext[:, 23:24]], axis=1)
    rfoot = jnp.concatenate([ext[:, 19:23], ext[:, 24:25]], axis=1)
    maxf = 7 * feat
    toks = []
    for t_ in (spine, lhand, rhand, lfoot, rfoot):
        flat = t_.reshape(b, 1, t_.shape[1] * feat, T)
        toks.append(jnp.pad(flat, ((0, 0), (0, 0), (0, maxf - flat.shape[2]),
                                   (0, 0))))
    mg = jnp.concatenate(toks, axis=1)                            # [b,5,84,T]
    t5 = T // 5
    tp = mg.reshape(b, 5, maxf, 5, t5)                            # b j f five t
    seq = jnp.transpose(tp, (0, 1, 4, 2, 3)).reshape(b, 5 * t5, maxf * 5)
    return seq                                                    # [b, T, 420]


def output_attend_rearrange(y):
    """y: [b, T, 420] -> [b, 263, 1, T]."""
    b, T, _ = y.shape
    t5 = T // 5
    tp = y.reshape(b, 5, t5, 84, 5)                               # b j t f five
    tp = jnp.transpose(tp, (0, 1, 3, 4, 2))                       # b j f five t
    mg = tp.reshape(b, 5, 84, T)
    mat = jnp.transpose(mg.reshape(b, 5, 7, 12, T), (1, 2, 3, 4, 0))  # j 7 f t b
    spine = mat[0][:7]
    lhand = mat[1][:4]
    rhand = mat[2][:4]
    lfoot = mat[3][:5]
    rfoot = mat[4][:5]
    foot_contact = jnp.concatenate([lfoot[-1:], rfoot[-1:]], axis=0)
    recon = jnp.concatenate([spine, lhand, rhand, lfoot[:-1], rfoot[:-1],
                             foot_contact], axis=0)               # [25,12,T,b]
    root = recon[0, :4]
    motion = recon[1:-2]
    foot = recon[-2:, :2].reshape(4, T, b)
    vel = motion[:, -3:].reshape(22 * 3, T, b)
    movement = motion[:-1, :-3]
    rotations = movement[:, -6:].reshape(21 * 6, T, b)
    positions = movement[:, :3].reshape(21 * 3, T, b)
    humanml = jnp.concatenate([root, positions, rotations, vel, foot], axis=0)
    out = jnp.transpose(humanml, (2, 0, 1))                       # [b,263,T]
    return out[:, :, None, :]                                     # [b,263,1,T]


# ----------------------------------------------------------------------------
# MdmAttend forward
# ----------------------------------------------------------------------------
def mdm_attend_forward(params, x, timesteps, enc_text, y_mask, uncond=False):
    """x: [bs, 263, 1, nframes], timesteps: [bs] int32,
    enc_text: [bs, clip_dim] (precomputed CLIP features),
    y_mask: [bs, 1, 1, nframes] bool, True == valid frame.
    Returns [bs, 263, 1, nframes]."""
    bs, _, _, T = x.shape
    D = params["pe"].shape[1]

    # --- embed_timestep + embed_text(mask_cond(enc_text)) — one fused kernel --
    t_in = params["pe"][timesteps]                                # [bs, D]
    txt = jnp.zeros_like(enc_text) if uncond else enc_text        # eval mask_cond
    emb = pallas_cond_embed(t_in, txt, params)                    # [bs, D]

    # --- InputAttendProcess (lane-dense padded 420 -> 512) --------------------
    seq_in = input_attend_rearrange(x)                            # [bs, T, 420]
    seq_in = jnp.pad(seq_in, ((0, 0), (0, 0),
                              (0, POSE_FEATS_PAD - POSE_FEATS)))  # [bs, T, 512]
    xemb = pallas_linear(seq_in.reshape(bs * T, POSE_FEATS_PAD),
                         params["ip_w"], params["ip_b"]).reshape(bs, T, D)

    # --- concat emb token + positional encoding (batch-major), pad S ---------
    xseq = jnp.concatenate([emb[:, None, :], xemb], axis=1)       # [bs, T+1, D]
    S = T + 1
    s_pad = _round_up(S, 16)
    xseq = jnp.pad(xseq, ((0, 0), (0, s_pad - S), (0, 0)))
    xseq = xseq + params["pe"][:s_pad][None, :, :]

    # --- _create_mask: key-padding bias (pad positions also masked) ----------
    # NOTE: pad KEYS get NEG_INF for every query, so valid rows never attend to
    # them; pad QUERY rows become uniform/garbage but are sliced off below.
    m = jnp.logical_not(y_mask[:, 0, 0, :])                       # [bs, T], True==pad
    m = jnp.concatenate([jnp.zeros((bs, 1), dtype=bool), m,
                         jnp.ones((bs, s_pad - S), dtype=bool)], axis=1)
    mask_bias = jnp.where(m, NEG_INF, 0.0).astype(jnp.float32)[:, None, :]

    # --- nn.TransformerEncoder (post-norm, gelu, eval) ------------------------
    for lp in params["layers"]:
        xseq = transformer_encoder_layer(xseq, mask_bias, lp, params["num_heads"])

    out_tokens = xseq[:, 1:S, :]                                  # drop emb token
    y = pallas_linear(out_tokens.reshape(bs * T, D),
                      params["op_w"], params["op_b"])             # [bs*T, 512]
    y = y[:, :POSE_FEATS].reshape(bs, T, POSE_FEATS)
    return output_attend_rearrange(y)                             # [bs,263,1,T]


# ----------------------------------------------------------------------------
# Parameter init (matmul weights stored bf16, biases / LN / pe in f32)
# ----------------------------------------------------------------------------
def _dense_init(key, fan_in, fan_out):
    kw, kb = jax.random.split(key)
    bound = 1.0 / math.sqrt(fan_in)
    w = jax.random.uniform(kw, (fan_in, fan_out), jnp.float32, -bound, bound)
    b = jax.random.uniform(kb, (fan_out,), jnp.float32, -bound, bound)
    return w.astype(jnp.bfloat16), b


def init_params(key, *, latent_dim, clip_dim, ff_size, num_heads, num_layers,
                max_len=1024):
    D = latent_dim
    ks = list(jax.random.split(key, 5 + num_layers))

    position = jnp.arange(max_len, dtype=jnp.float32)[:, None]
    div_term = jnp.exp(jnp.arange(0, D, 2, dtype=jnp.float32)
                       * (-math.log(10000.0) / D))
    pe = jnp.zeros((max_len, D), jnp.float32)
    pe = pe.at[:, 0::2].set(jnp.sin(position * div_term))
    pe = pe.at[:, 1::2].set(jnp.cos(position * div_term))

    te_w1, te_b1 = _dense_init(ks[0], D, D)            # TimestepEmbedder lin 1
    te_w2, te_b2 = _dense_init(ks[1], D, D)            # TimestepEmbedder lin 2
    et_w, et_b = _dense_init(ks[2], clip_dim, D)       # embed_text

    # InputAttendProcess.pose_embedding: zero-pad K 420 -> 512 (lane-dense)
    ip_w, ip_b = _dense_init(ks[3], POSE_FEATS, D)
    ip_w = jnp.pad(ip_w, ((0, POSE_FEATS_PAD - POSE_FEATS), (0, 0)))
    # OutputProcess.poseFinal: zero-pad N 420 -> 512 (lane-dense stores)
    op_w, op_b = _dense_init(ks[4], D, POSE_FEATS)
    op_w = jnp.pad(op_w, ((0, 0), (0, POSE_FEATS_PAD - POSE_FEATS)))
    op_b = jnp.pad(op_b, (0, POSE_FEATS_PAD - POSE_FEATS))

    dh = D // num_heads
    q_scale = jnp.concatenate([jnp.full((D,), 1.0 / math.sqrt(dh), jnp.float32),
                               jnp.ones((2 * D,), jnp.float32)])

    layers = []
    for i in range(num_layers):
        lk = list(jax.random.split(ks[5 + i], 4))
        w_in, b_in = _dense_init(lk[0], D, 3 * D)      # MHA in_proj (QKV)
        # Fold 1/sqrt(head_dim) into the Q third of in_proj (no in-kernel rescale)
        w_in = (w_in.astype(jnp.float32) * q_scale[None, :]).astype(jnp.bfloat16)
        b_in = b_in * q_scale
        w_o, b_o = _dense_init(lk[1], D, D)            # MHA out_proj
        w_ff1, b_ff1 = _dense_init(lk[2], D, ff_size)
        w_ff2, b_ff2 = _dense_init(lk[3], ff_size, D)
        layers.append(dict(
            w_in=w_in, b_in=b_in, w_o=w_o, b_o=b_o,
            w_ff1=w_ff1, b_ff1=b_ff1, w_ff2=w_ff2, b_ff2=b_ff2,
            ln1_g=jnp.ones((D,), jnp.float32), ln1_b=jnp.zeros((D,), jnp.float32),
            ln2_g=jnp.ones((D,), jnp.float32), ln2_b=jnp.zeros((D,), jnp.float32)))

    return dict(pe=pe, te_w1=te_w1, te_b1=te_b1, te_w2=te_w2, te_b2=te_b2,
                et_w=et_w, et_b=et_b, ip_w=ip_w, ip_b=ip_b,
                op_w=op_w, op_b=op_b, layers=layers, num_heads=num_heads)


if __name__ == "__main__":
    # Small analogue of (latent=1024, heads=8, ff=2048, layers=8, clip=512).
    # D/H chosen so head_dim = 128 (lane-aligned, like the real model).
    BS, FEATS, T = 2, 263, 10       # x: [batch, 263, 1, nframes], T % 5 == 0
    D, H, FF, L, CLIP = 256, 2, 512, 2, 64

    key = jax.random.PRNGKey(0)
    kx, kt, kc, kp = jax.random.split(key, 4)
    x = jax.random.normal(kx, (BS, FEATS, 1, T), jnp.float32)
    timesteps = jax.random.randint(kt, (BS,), 0, 1000)
    enc_text = jax.random.normal(kc, (BS, CLIP), jnp.float32)
    lengths = jnp.array([T, T - 3])
    y_mask = (jnp.arange(T)[None, :] < lengths[:, None])[:, None, None, :]

    params = init_params(kp, latent_dim=D, clip_dim=CLIP, ff_size=FF,
                         num_heads=H, num_layers=L)

    out = mdm_attend_forward(params, x, timesteps, enc_text, y_mask)
    out = jax.block_until_ready(out)
    assert out.shape == (BS, FEATS, 1, T), out.shape
    assert bool(jnp.all(jnp.isfinite(out)))
    print("KERNEL_OK")
</pallas_src>

<mosaic_0001>
module attributes {stable_mosaic.version = 11 : i64} {
  func.func @_cond_embed_kernel(%arg0: i32, %arg1: memref<8x256xf32, #tpu.memory_space<vmem>>, %arg2: memref<8x64xf32, #tpu.memory_space<vmem>>, %arg3: memref<256x256xbf16, #tpu.memory_space<vmem>>, %arg4: memref<1x256xf32, #tpu.memory_space<vmem>>, %arg5: memref<256x256xbf16, #tpu.memory_space<vmem>>, %arg6: memref<1x256xf32, #tpu.memory_space<vmem>>, %arg7: memref<64x256xbf16, #tpu.memory_space<vmem>>, %arg8: memref<1x256xf32, #tpu.memory_space<vmem>>, %arg9: memref<8x256xf32, #tpu.memory_space<vmem>>) attributes {dimension_semantics = [#tpu.dimension_semantics<arbitrary>], iteration_bounds = array<i64: 1>, scalar_prefetch = 0 : i64, scratch_operands = 0 : i64, tpu.core_type = #tpu.core_type<tc>, window_params = [{pipeline_mode = #tpu.pipeline_mode<synchronous>, transform_indices = @transform_0, window_bounds = array<i64: 8, 256>}, {pipeline_mode = #tpu.pipeline_mode<synchronous>, transform_indices = @transform_1, window_bounds = array<i64: 8, 64>}, {pipeline_mode = #tpu.pipeline_mode<synchronous>, transform_indices = @transform_2, window_bounds = array<i64: 256, 256>}, {pipeline_mode = #tpu.pipeline_mode<synchronous>, transform_indices = @transform_3, window_bounds = array<i64: 1, 256>}, {pipeline_mode = #tpu.pipeline_mode<synchronous>, transform_indices = @transform_4, window_bounds = array<i64: 256, 256>}, {pipeline_mode = #tpu.pipeline_mode<synchronous>, transform_indices = @transform_5, window_bounds = array<i64: 1, 256>}, {pipeline_mode = #tpu.pipeline_mode<synchronous>, transform_indices = @transform_6, window_bounds = array<i64: 64, 256>}, {pipeline_mode = #tpu.pipeline_mode<synchronous>, transform_indices = @transform_7, window_bounds = array<i64: 1, 256>}, {pipeline_mode = #tpu.pipeline_mode<synchronous>, transform_indices = @transform_8, window_bounds = array<i64: 8, 256>}]} {
    %c0 = arith.constant 0 : index
    %c0_0 = arith.constant 0 : index
    %0 = vector.load %arg1[%c0, %c0_0] : memref<8x256xf32, #tpu.memory_space<vmem>>, vector<8x256xf32>
    %1 = arith.truncf %0 : vector<8x256xf32> to vector<8x256xbf16>
    %c0_1 = arith.constant 0 : index
    %c0_2 = arith.constant 0 : index
    %2 = vector.load %arg3[%c0_1, %c0_2] : memref<256x256xbf16, #tpu.memory_space<vmem>>, vector<256x256xbf16>
    %cst = arith.constant dense<0.000000e+00> : vector<8x256xf32>
    %3 = tpu.matmul %1, %2, %cst {dimension_numbers = #tpu.dot_dimension_numbers<[1], [0], [0], [1], [0, 0, 1, 1], [], []>} : vector<8x256xbf16>, vector<256x256xbf16>, vector<8x256xf32> -> vector<8x256xf32>
    %c0_3 = arith.constant 0 : index
    %c0_4 = arith.constant 0 : index
    %4 = vector.load %arg4[%c0_3, %c0_4] : memref<1x256xf32, #tpu.memory_space<vmem>>, vector<1x256xf32>
    %5 = vector.broadcast %4 : vector<1x256xf32> to vector<8x256xf32>
    %6 = arith.addf %3, %5 : vector<8x256xf32>
    %cst_5 = arith.constant 0.000000e+00 : f32
    %7 = vector.broadcast %cst_5 : f32 to vector<8x256xf32>
    %8 = arith.subf %7, %6 : vector<8x256xf32>
    %9 = math.exp %8 : vector<8x256xf32>
    %cst_6 = arith.constant 1.000000e+00 : f32
    %10 = vector.broadcast %cst_6 : f32 to vector<8x256xf32>
    %11 = arith.addf %10, %9 : vector<8x256xf32>
    %cst_7 = arith.constant 1.000000e+00 : f32
    %12 = vector.broadcast %cst_7 : f32 to vector<8x256xf32>
    %13 = arith.divf %12, %11 : vector<8x256xf32>
    %14 = arith.mulf %6, %13 : vector<8x256xf32>
    %15 = arith.truncf %14 : vector<8x256xf32> to vector<8x256xbf16>
    %c0_8 = arith.constant 0 : index
    %c0_9 = arith.constant 0 : index
    %16 = vector.load %arg5[%c0_8, %c0_9] : memref<256x256xbf16, #tpu.memory_space<vmem>>, vector<256x256xbf16>
    %cst_10 = arith.constant dense<0.000000e+00> : vector<8x256xf32>
    %17 = tpu.matmul %15, %16, %cst_10 {dimension_numbers = #tpu.dot_dimension_numbers<[1], [0], [0], [1], [0, 0, 1, 1], [], []>} : vector<8x256xbf16>, vector<256x256xbf16>, vector<8x256xf32> -> vector<8x256xf32>
    %c0_11 = arith.constant 0 : index
    %c0_12 = arith.constant 0 : index
    %18 = vector.load %arg6[%c0_11, %c0_12] : memref<1x256xf32, #tpu.memory_space<vmem>>, vector<1x256xf32>
    %19 = vector.broadcast %18 : vector<1x256xf32> to vector<8x256xf32>
    %20 = arith.addf %17, %19 : vector<8x256xf32>
    %c0_13 = arith.constant 0 : index
    %c0_14 = arith.constant 0 : index
    %21 = vector.load %arg2[%c0_13, %c0_14] : memref<8x64xf32, #tpu.memory_space<vmem>>, vector<8x64xf32>
    %22 = arith.truncf %21 : vector<8x64xf32> to vector<8x64xbf16>
    %c0_15 = arith.constant 0 : index
    %c0_16 = arith.constant 0 : index
    %23 = vector.load %arg7[%c0_15, %c0_16] : memref<64x256xbf16, #tpu.memory_space<vmem>>, vector<64x256xbf16>
    %cst_17 = arith.constant dense<0.000000e+00> : vector<8x256xf32>
    %24 = tpu.matmul %22, %23, %cst_17 {dimension_numbers = #tpu.dot_dimension_numbers<[1], [0], [0], [1], [0, 0, 1, 1], [], []>} : vector<8x64xbf16>, vector<64x256xbf16>, vector<8x256xf32> -> vector<8x256xf32>
    %25 = arith.addf %20, %24 : vector<8x256xf32>
    %c0_18 = arith.constant 0 : index
    %c0_19 = arith.constant 0 : index
    %26 = vector.load %arg8[%c0_18, %c0_19] : memref<1x256xf32, #tpu.memory_space<vmem>>, vector<1x256xf32>
    %27 = vector.broadcast %26 : vector<1x256xf32> to vector<8x256xf32>
    %28 = arith.addf %25, %27 : vector<8x256xf32>
    %c0_20 = arith.constant 0 : index
    %c0_21 = arith.constant 0 : index
    %29 = vector.load %arg9[%c0_20, %c0_21] : memref<8x256xf32, #tpu.memory_space<vmem>>, vector<8x256xf32>
    tpu.vector_store %arg9[%c0_20, %c0_21], %28 {strides = array<i32>} : memref<8x256xf32, #tpu.memory_space<vmem>>, vector<8x256xf32>,
    return
  }
  func.func @transform_0(%arg0: i32) -> (i32, i32) {
    %c0_i32 = arith.constant 0 : i32
    %c0_i32_0 = arith.constant 0 : i32
    %c0_i32_1 = arith.constant 0 : i32
    return %c0_i32, %c0_i32_0 : i32, i32
  }
  func.func @transform_1(%arg0: i32) -> (i32, i32) {
    %c0_i32 = arith.constant 0 : i32
    %c0_i32_0 = arith.constant 0 : i32
    %c0_i32_1 = arith.constant 0 : i32
    return %c0_i32, %c0_i32_0 : i32, i32
  }
  func.func @transform_2(%arg0: i32) -> (i32, i32) {
    %c0_i32 = arith.constant 0 : i32
    %c0_i32_0 = arith.constant 0 : i32
    %c0_i32_1 = arith.constant 0 : i32
    return %c0_i32, %c0_i32_0 : i32, i32
  }
  func.func @transform_3(%arg0: i32) -> (i32, i32) {
    %c0_i32 = arith.constant 0 : i32
    %c0_i32_0 = arith.constant 0 : i32
    %c0_i32_1 = arith.constant 0 : i32
    return %c0_i32, %c0_i32_0 : i32, i32
  }
  func.func @transform_4(%arg0: i32) -> (i32, i32) {
    %c0_i32 = arith.constant 0 : i32
    %c0_i32_0 = arith.constant 0 : i32
    %c0_i32_1 = arith.constant 0 : i32
    return %c0_i32, %c0_i32_0 : i32, i32
  }
  func.func @transform_5(%arg0: i32) -> (i32, i32) {
    %c0_i32 = arith.constant 0 : i32
    %c0_i32_0 = arith.constant 0 : i32
    %c0_i32_1 = arith.constant 0 : i32
    return %c0_i32, %c0_i32_0 : i32, i32
  }
  func.func @transform_6(%arg0: i32) -> (i32, i32) {
    %c0_i32 = arith.constant 0 : i32
    %c0_i32_0 = arith.constant 0 : i32
    %c0_i32_1 = arith.constant 0 : i32
    return %c0_i32, %c0_i32_0 : i32, i32
  }
  func.func @transform_7(%arg0: i32) -> (i32, i32) {
    %c0_i32 = arith.constant 0 : i32
    %c0_i32_0 = arith.constant 0 : i32
    %c0_i32_1 = arith.constant 0 : i32
    return %c0_i32, %c0_i32_0 : i32, i32
  }
  func.func @transform_8(%arg0: i32) -> (i32, i32) {
    %c0_i32 = arith.constant 0 : i32
    %c0_i32_0 = arith.constant 0 : i32
    %c0_i32_1 = arith.constant 0 : i32
    return %c0_i32, %c0_i32_0 : i32, i32
  }
}

</mosaic_0001>

<llo_original>
// kernel: tpu_custom_call.1
$region0: #{tpu_custom_call.1}
  #allocation0 [shape = 'u32[]', space=smem, size = 0x4, offset = 0x4, fixed_abs, tag = 'smem constant byte address 0x4 - core index']
  #allocation1 [shape = 'u32[144,128]{1,0:T(1,128)}', space=vmem, size = 0x12000, scoped, tag = 'internal scratch']
  %s0 = inlined_call_operand.hbm [shape: f32[8,256], index: 0, kind: input, shape index: {}]
  %s1 = inlined_call_operand.hbm [shape: f32[8,64], index: 1, kind: input, shape index: {}]
  %s2 = inlined_call_operand.hbm [shape: bf16[256,256], index: 2, kind: input, shape index: {}]
  %s3 = inlined_call_operand.vmem [shape: f32[1,256], index: 3, kind: input, shape index: {}]
  %s4 = inlined_call_operand.hbm [shape: bf16[256,256], index: 4, kind: input, shape index: {}]
  %s5 = inlined_call_operand.vmem [shape: f32[1,256], index: 5, kind: input, shape index: {}]
  %s6 = inlined_call_operand.hbm [shape: bf16[64,256], index: 6, kind: input, shape index: {}]
  %s7 = inlined_call_operand.vmem [shape: f32[1,256], index: 7, kind: input, shape index: {}]
  %s8 = inlined_call_operand.hbm [shape: f32[8,256], index: 8, kind: output, shape index: {}]
  %s9 = sld [smem:[#allocation0]]
  $region62: #{tpu_custom_call.1} parent=0
    _
  %s11 = ssub.s32 1, %s9
  %s12 = scalar_select 0, %s11, %s9
  $region1: #{tpu_custom_call.1} parent=0
    #allocation2 [shape = 'u8[8192]{0}', space=vmem, size = 0x2000, scoped, tag = 'input window, operand 0, single buffered']
    #allocation3 [shape = 's32[1]{0}', space=sflag, size = 0x4, scoped, tag = 'scoped memory for tpu_custom_call.1']
    #allocation4 [shape = 's32[1]{0}', space=sflag, size = 0x4, scoped, tag = 'scoped memory for tpu_custom_call.1']
    #allocation5 [shape = 'u8[4096]{0}', space=vmem, size = 0x1000, scoped, tag = 'input window, operand 1, single buffered']
    #allocation6 [shape = 's32[1]{0}', space=sflag, size = 0x4, scoped, tag = 'scoped memory for tpu_custom_call.1']
    #allocation7 [shape = 'u8[131072]{0}', space=vmem, size = 0x20000, scoped, tag = 'input window, operand 2, single buffered']
    #allocation8 [shape = 'u8[131072]{0}', space=vmem, size = 0x20000, scoped, tag = 'input window, operand 4, single buffered']
    #allocation9 [shape = 's32[1]{0}', space=sflag, size = 0x4, scoped, tag = 'scoped memory for tpu_custom_call.1']
    #allocation10 [shape = 'u8[32768]{0}', space=vmem, size = 0x8000, scoped, tag = 'input window, operand 6, single buffered']
    #allocation11 [shape = 'u8[8192]{0}', space=vmem, size = 0x2000, scoped, tag = 'output window, operand 0, single buffered']
    %13 = vsyncpa [#allocation3], 0
    %14 = vsyncpa [#allocation6], 0
    %15 = vsyncpa [#allocation9], 0
    %16 = vsyncpa [#allocation4], 0
    // Predicated region
    $region2: #{tpu_custom_call.1} parent=1 // pred_check
      _
    $region3: #{tpu_custom_call.1} parent=1 // pred_check_branch
      %18 = sbr.rel (0) target = $region5
    $region4: #{tpu_custom_call.1} parent=1 // pred_region
      %s20 = ssub.s32 256, 256
      %21 = vsyncadd [#allocation3], %s20
      %s23 = sshll.u32 [#allocation2], 4
      %s24 = int_to_ptr.vmem [resolvable:$true] %s23
      %26 = dma.hbm_to_vmem [thread:$0]  %s0, 256, %s24, [#allocation3]
    $region5: #{tpu_custom_call.1} parent=1 // pred_fallthru
      _
    // Predicated region
    $region6: #{tpu_custom_call.1} parent=1 // pred_check
      _
    $region7: #{tpu_custom_call.1} parent=1 // pred_check_branch
      %28 = sbr.rel (0) target = $region9
    $region8: #{tpu_custom_call.1} parent=1 // pred_region
      %s30 = ssub.s32 128, 128
      %31 = vsyncadd [#allocation6], %s30
      %s33 = sshll.u32 [#allocation5], 4
      %s34 = int_to_ptr.vmem [resolvable:$true] %s33
      %36 = dma.hbm_to_vmem [thread:$0]  %s1, 128, %s34, [#allocation6]
    $region9: #{tpu_custom_call.1} parent=1 // pred_fallthru
      _
    // Predicated region
    $region10: #{tpu_custom_call.1} parent=1 // pred_check
      _
    $region11: #{tpu_custom_call.1} parent=1 // pred_check_branch
      %38 = sbr.rel (0) target = $region13
    $region12: #{tpu_custom_call.1} parent=1 // pred_region
      %s40 = ssub.s32 4096, 4096
      %41 = vsyncadd [#allocation6], %s40
      %s42 = sshll.u32 [#allocation7], 4
      %s43 = int_to_ptr.vmem [resolvable:$true] %s42
      %48 = dma.hbm_to_vmem [thread:$0]  %s2, 4096, %s43, [#allocation6], 128, 128, 8
    $region13: #{tpu_custom_call.1} parent=1 // pred_fallthru
      _
    // Predicated region
    $region14: #{tpu_custom_call.1} parent=1 // pred_check
      _
    $region15: #{tpu_custom_call.1} parent=1 // pred_check_branch
      %50 = sbr.rel (0) target = $region17
    $region16: #{tpu_custom_call.1} parent=1 // pred_region
      _
    $region17: #{tpu_custom_call.1} parent=1 // pred_fallthru
      _
    // Predicated region
    $region18: #{tpu_custom_call.1} parent=1 // pred_check
      _
    $region19: #{tpu_custom_call.1} parent=1 // pred_check_branch
      %52 = sbr.rel (0) target = $region21
    $region20: #{tpu_custom_call.1} parent=1 // pred_region
      %s54 = ssub.s32 4096, 4096
      %55 = vsyncadd [#allocation9], %s54
      %s56 = sshll.u32 [#allocation8], 4
      %s57 = int_to_ptr.vmem [resolvable:$true] %s56
      %62 = dma.hbm_to_vmem [thread:$0]  %s4, 4096, %s57, [#allocation9], 128, 128, 8
    $region21: #{tpu_custom_call.1} parent=1 // pred_fallthru
      _
    // Predicated region
    $region22: #{tpu_custom_call.1} parent=1 // pred_check
      _
    $region23: #{tpu_custom_call.1} parent=1 // pred_check_branch
      %64 = sbr.rel (0) target = $region25
    $region24: #{tpu_custom_call.1} parent=1 // pred_region
      _
    $region25: #{tpu_custom_call.1} parent=1 // pred_fallthru
      _
    // Predicated region
    $region26: #{tpu_custom_call.1} parent=1 // pred_check
      _
    $region27: #{tpu_custom_call.1} parent=1 // pred_check_branch
      %66 = sbr.rel (0) target = $region29
    $region28: #{tpu_custom_call.1} parent=1 // pred_region
      %s68 = ssub.s32 1024, 1024
      %69 = vsyncadd [#allocation9], %s68
      %s70 = sshll.u32 [#allocation10], 4
      %s71 = int_to_ptr.vmem [resolvable:$true] %s70
      %76 = dma.hbm_to_vmem [thread:$0]  %s6, 1024, %s71, [#allocation9], 128, 128, 8
    $region29: #{tpu_custom_call.1} parent=1 // pred_fallthru
      _
    // Predicated region
    $region30: #{tpu_custom_call.1} parent=1 // pred_check
      _
    $region31: #{tpu_custom_call.1} parent=1 // pred_check_branch
      %78 = sbr.rel (0) target = $region33
    $region32: #{tpu_custom_call.1} parent=1 // pred_region
      _
    $region33: #{tpu_custom_call.1} parent=1 // pred_fallthru
      _
    // Predicated region
    $region34: #{tpu_custom_call.1} parent=1 // pred_check
      _
    $region35: #{tpu_custom_call.1} parent=1 // pred_check_branch
      %80 = sbr.rel (0) target = $region37
    $region36: #{tpu_custom_call.1} parent=1 // pred_region
      %81 = dma.done [#allocation3], 256
    $region37: #{tpu_custom_call.1} parent=1 // pred_fallthru
      _
    // Predicated region
    $region38: #{tpu_custom_call.1} parent=1 // pred_check
      _
    $region39: #{tpu_custom_call.1} parent=1 // pred_check_branch
      %83 = sbr.rel (0) target = $region41
    $region40: #{tpu_custom_call.1} parent=1 // pred_region
      %84 = dma.done [#allocation6], 128
    $region41: #{tpu_custom_call.1} parent=1 // pred_fallthru
      _
    // Predicated region
    $region42: #{tpu_custom_call.1} parent=1 // pred_check
      _
    $region43: #{tpu_custom_call.1} parent=1 // pred_check_branch
      %86 = sbr.rel (0) target = $region45
    $region44: #{tpu_custom_call.1} parent=1 // pred_region
      %87 = dma.done [#allocation6], 4096
    $region45: #{tpu_custom_call.1} parent=1 // pred_fallthru
      _
    // Predicated region
    $region46: #{tpu_custom_call.1} parent=1 // pred_check
      _
    $region47: #{tpu_custom_call.1} parent=1 // pred_check_branch
      %89 = sbr.rel (0) target = $region49
    $region48: #{tpu_custom_call.1} parent=1 // pred_region
      %90 = dma.done [#allocation9], 4096
    $region49: #{tpu_custom_call.1} parent=1 // pred_fallthru
      _
    // Predicated region
    $region50: #{tpu_custom_call.1} parent=1 // pred_check
      _
    $region51: #{tpu_custom_call.1} parent=1 // pred_check_branch
      %92 = sbr.rel (0) target = $region53
    $region52: #{tpu_custom_call.1} parent=1 // pred_region
      %93 = dma.done [#allocation9], 1024
    $region53: #{tpu_custom_call.1} parent=1 // pred_fallthru
      _
    %v95 = vld [vmem:[#allocation2] sm:$0xff]
    %v96 = vld [vmem:[#allocation2 + $0x8] sm:$0xff]
    %v97 = vpack.c.bf16 %v95, %v95
    %v98 = vpack.c.bf16 %v96, %v96
    %v99 = vld [vmem:[#allocation7] sm:$0xff]
    %v100 = vld [vmem:[#allocation7 + $0x8] sm:$0xff]
    %v101 = vld [vmem:[#allocation7 + $0x10] sm:$0xff]
    %v102 = vld [vmem:[#allocation7 + $0x18] sm:$0xff]
    %v103 = vld [vmem:[#allocation7 + $0x20] sm:$0xff]
    %v104 = vld [vmem:[#allocation7 + $0x28] sm:$0xff]
    %v105 = vld [vmem:[#allocation7 + $0x30] sm:$0xff]
    %v106 = vld [vmem:[#allocation7 + $0x38] sm:$0xff]
    %v107 = vld [vmem:[#allocation7 + $0x40] sm:$0xff]
    %v108 = vld [vmem:[#allocation7 + $0x48] sm:$0xff]
    %v109 = vld [vmem:[#allocation7 + $0x50] sm:$0xff]
    %v110 = vld [vmem:[#allocation7 + $0x58] sm:$0xff]
    %v111 = vld [vmem:[#allocation7 + $0x60] sm:$0xff]
    %v112 = vld [vmem:[#allocation7 + $0x68] sm:$0xff]
    %v113 = vld [vmem:[#allocation7 + $0x70] sm:$0xff]
    %v114 = vld [vmem:[#allocation7 + $0x78] sm:$0xff]
    %v115 = vld [vmem:[#allocation7 + $0x80] sm:$0xff]
    %v116 = vld [vmem:[#allocation7 + $0x88] sm:$0xff]
    %v117 = vld [vmem:[#allocation7 + $0x90] sm:$0xff]
    %v118 = vld [vmem:[#allocation7 + $0x98] sm:$0xff]
    %v119 = vld [vmem:[#allocation7 + $0xa0] sm:$0xff]
    %v120 = vld [vmem:[#allocation7 + $0xa8] sm:$0xff]
    %v121 = vld [vmem:[#allocation7 + $0xb0] sm:$0xff]
    %v122 = vld [vmem:[#allocation7 + $0xb8] sm:$0xff]
    %v123 = vld [vmem:[#allocation7 + $0xc0] sm:$0xff]
    %v124 = vld [vmem:[#allocation7 + $0xc8] sm:$0xff]
    %v125 = vld [vmem:[#allocation7 + $0xd0] sm:$0xff]
    %v126 = vld [vmem:[#allocation7 + $0xd8] sm:$0xff]
    %v127 = vld [vmem:[#allocation7 + $0xe0] sm:$0xff]
    %v128 = vld [vmem:[#allocation7 + $0xe8] sm:$0xff]
    %v129 = vld [vmem:[#allocation7 + $0xf0] sm:$0xff]
    %v130 = vld [vmem:[#allocation7 + $0xf8] sm:$0xff]
    %v131 = vld [vmem:[%s3] sm:$0x3]
    %v133 = vlaneseq
    %v134 = vshrl.u32 %v133, 7
    %v135 = vsub.s32 0, %v134
    %v136 = vrot.slane %v131, %v135
    %v137 = vlaneseq
    %v138 = vshrl.u32 %v137, 7
    %v139 = vsub.s32 1, %v138
    %v140 = vrot.slane %v131, %v139
    %v175 = vunpack.c.l.b16 %v99
    %v176 = vunpack.c.h.b16 %v99
    %v177 = vunpack.c.l.b16 %v100
    %v178 = vunpack.c.h.b16 %v100
    %v179 = vunpack.c.l.b16 %v101
    %v180 = vunpack.c.h.b16 %v101
    %v181 = vunpack.c.l.b16 %v102
    %v182 = vunpack.c.h.b16 %v102
    %v183 = vunpack.c.l.b16 %v103
    %v184 = vunpack.c.h.b16 %v103
    %v185 = vunpack.c.l.b16 %v104
    %v186 = vunpack.c.h.b16 %v104
    %v187 = vunpack.c.l.b16 %v105
    %v188 = vunpack.c.h.b16 %v105
    %v189 = vunpack.c.l.b16 %v106
    %v190 = vunpack.c.h.b16 %v106
    %v191 = vunpack.c.l.b16 %v107
    %v192 = vunpack.c.h.b16 %v107
    %v193 = vunpack.c.l.b16 %v108
    %v194 = vunpack.c.h.b16 %v108
    %v195 = vunpack.c.l.b16 %v109
    %v196 = vunpack.c.h.b16 %v109
    %v197 = vunpack.c.l.b16 %v110
    %v198 = vunpack.c.h.b16 %v110
    %v199 = vunpack.c.l.b16 %v111
    %v200 = vunpack.c.h.b16 %v111
    %v201 = vunpack.c.l.b16 %v112
    %v202 = vunpack.c.h.b16 %v112
    %v203 = vunpack.c.l.b16 %v113
    %v204 = vunpack.c.h.b16 %v113
    %v205 = vunpack.c.l.b16 %v114
    %v206 = vunpack.c.h.b16 %v114
    %v207 = vunpack.c.l.b16 %v115
    %v208 = vunpack.c.h.b16 %v115
    %v209 = vunpack.c.l.b16 %v116
    %v210 = vunpack.c.h.b16 %v116
    %v211 = vunpack.c.l.b16 %v117
    %v212 = vunpack.c.h.b16 %v117
    %v213 = vunpack.c.l.b16 %v118
    %v214 = vunpack.c.h.b16 %v118
    %v215 = vunpack.c.l.b16 %v119
    %v216 = vunpack.c.h.b16 %v119
    %v217 = vunpack.c.l.b16 %v120
    %v218 = vunpack.c.h.b16 %v120
    %v219 = vunpack.c.l.b16 %v121
    %v220 = vunpack.c.h.b16 %v121
    %v221 = vunpack.c.l.b16 %v122
    %v222 = vunpack.c.h.b16 %v122
    %v223 = vunpack.c.l.b16 %v123
    %v224 = vunpack.c.h.b16 %v123
    %v225 = vunpack.c.l.b16 %v124
    %v226 = vunpack.c.h.b16 %v124
    %v227 = vunpack.c.l.b16 %v125
    %v228 = vunpack.c.h.b16 %v125
    %v229 = vunpack.c.l.b16 %v126
    %v230 = vunpack.c.h.b16 %v126
    %v231 = vunpack.c.l.b16 %v127
    %v232 = vunpack.c.h.b16 %v127
    %v233 = vunpack.c.l.b16 %v128
    %v234 = vunpack.c.h.b16 %v128
    %v235 = vunpack.c.l.b16 %v129
    %v236 = vunpack.c.h.b16 %v129
    %v237 = vunpack.c.l.b16 %v130
    %v238 = vunpack.c.h.b16 %v130
    %v239 = vpack.c.b16 %v177, %v175
    %v240 = vpack.c.b16 %v178, %v176
    %v241 = vpack.c.b16 %v181, %v179
    %v242 = vpack.c.b16 %v182, %v180
    %v243 = vpack.c.b16 %v185, %v183
    %v244 = vpack.c.b16 %v186, %v184
    %v245 = vpack.c.b16 %v189, %v187
    %v246 = vpack.c.b16 %v190, %v188
    %v247 = vpack.c.b16 %v193, %v191
    %v248 = vpack.c.b16 %v194, %v192
    %v249 = vpack.c.b16 %v197, %v195
    %v250 = vpack.c.b16 %v198, %v196
    %v251 = vpack.c.b16 %v201, %v199
    %v252 = vpack.c.b16 %v202, %v200
    %v253 = vpack.c.b16 %v205, %v203
    %v254 = vpack.c.b16 %v206, %v204
    %v255 = vpack.c.b16 %v209, %v207
    %v256 = vpack.c.b16 %v210, %v208
    %v257 = vpack.c.b16 %v213, %v211
    %v258 = vpack.c.b16 %v214, %v212
    %v259 = vpack.c.b16 %v217, %v215
    %v260 = vpack.c.b16 %v218, %v216
    %v261 = vpack.c.b16 %v221, %v219
    %v262 = vpack.c.b16 %v222, %v220
    %v263 = vpack.c.b16 %v225, %v223
    %v264 = vpack.c.b16 %v226, %v224
    %v265 = vpack.c.b16 %v229, %v227
    %v266 = vpack.c.b16 %v230, %v228
    %v267 = vpack.c.b16 %v233, %v231
    %v268 = vpack.c.b16 %v234, %v232
    %v269 = vpack.c.b16 %v237, %v235
    %v270 = vpack.c.b16 %v238, %v236
    %303 = vmatprep.subr.bf16.mxu0 %v240
    %304 = vmatpush1.bf16.msra.mxu0 %v239
    %305 = vmatprep.subr.bf16.mxu0 %v242
    %306 = vmatpush1.bf16.msra.mxu0 %v241
    %307 = vmatprep.subr.bf16.mxu0 %v244
    %308 = vmatpush1.bf16.msra.mxu0 %v243
    %309 = vmatprep.subr.bf16.mxu0 %v246
    %310 = vmatpush1.bf16.msra.mxu0 %v245
    %311 = vmatprep.subr.bf16.mxu0 %v248
    %312 = vmatpush1.bf16.msra.mxu0 %v247
    %313 = vmatprep.subr.bf16.mxu0 %v250
    %314 = vmatpush1.bf16.msra.mxu0 %v249
    %315 = vmatprep.subr.bf16.mxu0 %v252
    %316 = vmatpush1.bf16.msra.mxu0 %v251
    %317 = vmatprep.subr.bf16.mxu0 %v254
    %318 = vmatpush1.bf16.msra.mxu0 %v253
    %319 = vmatprep.subr.bf16.mxu0 %v256
    %320 = vmatpush1.bf16.msra.mxu0 %v255
    %321 = vmatprep.subr.bf16.mxu0 %v258
    %322 = vmatpush1.bf16.msra.mxu0 %v257
    %323 = vmatprep.subr.bf16.mxu0 %v260
    %324 = vmatpush1.bf16.msra.mxu0 %v259
    %325 = vmatprep.subr.bf16.mxu0 %v262
    %326 = vmatpush1.bf16.msra.mxu0 %v261
    %327 = vmatprep.subr.bf16.mxu0 %v264
    %328 = vmatpush1.bf16.msra.mxu0 %v263
    %329 = vmatprep.subr.bf16.mxu0 %v266
    %330 = vmatpush1.bf16.msra.mxu0 %v265
    %331 = vmatprep.subr.bf16.mxu0 %v268
    %332 = vmatpush1.bf16.msra.mxu0 %v267
    %333 = vmatprep.subr.bf16.mxu0 %v270
    %334 = vmatpush1.bf16.msra.mxu0 %v269
    %335 = vmatprep.mubr.bf16.mxu0 %v98
    %336 = vmatmul.mubr.bf16.gmra.mrb[0].mxu0 %v97
    %v337 = vpop.f32.mrb[0].mxu0
    %v338 = vadd.f32 %v136, %v337
    %v339 = vpop.f32.mrb[0].mxu0
    %v340 = vadd.f32 %v140, %v339
    %v341 = vpop.f32.mrb[0].mxu0
    %v342 = vpop.f32.mrb[0].mxu0
    %343 = vdwg.mxu0
    %v344 = vsub.f32 0.0, %v338
    %v345 = vsub.f32 0.0, %v340
    %v346 = vmul.f32 %v344, 1.442695
    %v347 = vpow.pop %v346
    %v348 = vmul.f32 %v345, 1.442695
    %v349 = vpow.pop %v348
    %v350 = vadd.f32 %v347, 1.0
    %v351 = vadd.f32 %v349, 1.0
    %v352 = vrcp.pop %v350
    %v353 = vmul.f32 1.0, %v352
    %v354 = vrcp.pop %v351
    %v355 = vmul.f32 1.0, %v354
    %v356 = vmul.f32 %v338, %v353
    %v357 = vmul.f32 %v340, %v355
    %v358 = vpack.c.bf16 %v356, %v356
    %v359 = vpack.c.bf16 %v357, %v357
    %v360 = vld [vmem:[#allocation8] sm:$0xff]
    %v361 = vld [vmem:[#allocation8 + $0x8] sm:$0xff]
    %v362 = vld [vmem:[#allocation8 + $0x10] sm:$0xff]
    %v363 = vld [vmem:[#allocation8 + $0x18] sm:$0xff]
    %v364 = vld [vmem:[#allocation8 + $0x20] sm:$0xff]
    %v365 = vld [vmem:[#allocation8 + $0x28] sm:$0xff]
    %v366 = vld [vmem:[#allocation8 + $0x30] sm:$0xff]
    %v367 = vld [vmem:[#allocation8 + $0x38] sm:$0xff]
    %v368 = vld [vmem:[#allocation8 + $0x40] sm:$0xff]
    %v369 = vld [vmem:[#allocation8 + $0x48] sm:$0xff]
    %v370 = vld [vmem:[#allocation8 + $0x50] sm:$0xff]
    %v371 = vld [vmem:[#allocation8 + $0x58] sm:$0xff]
    %v372 = vld [vmem:[#allocation8 + $0x60] sm:$0xff]
    %v373 = vld [vmem:[#allocation8 + $0x68] sm:$0xff]
    %v374 = vld [vmem:[#allocation8 + $0x70] sm:$0xff]
    %v375 = vld [vmem:[#allocation8 + $0x78] sm:$0xff]
    %v376 = vld [vmem:[#allocation8 + $0x80] sm:$0xff]
    %v377 = vld [vmem:[#allocation8 + $0x88] sm:$0xff]
    %v378 = vld [vmem:[#allocation8 + $0x90] sm:$0xff]
    %v379 = vld [vmem:[#allocation8 + $0x98] sm:$0xff]
    %v380 = vld [vmem:[#allocation8 + $0xa0] sm:$0xff]
    %v381 = vld [vmem:[#allocation8 + $0xa8] sm:$0xff]
    %v382 = vld [vmem:[#allocation8 + $0xb0] sm:$0xff]
    %v383 = vld [vmem:[#allocation8 + $0xb8] sm:$0xff]
    %v384 = vld [vmem:[#allocation8 + $0xc0] sm:$0xff]
    %v385 = vld [vmem:[#allocation8 + $0xc8] sm:$0xff]
    %v386 = vld [vmem:[#allocation8 + $0xd0] sm:$0xff]
    %v387 = vld [vmem:[#allocation8 + $0xd8] sm:$0xff]
    %v388 = vld [vmem:[#allocation8 + $0xe0] sm:$0xff]
    %v389 = vld [vmem:[#allocation8 + $0xe8] sm:$0xff]
    %v390 = vld [vmem:[#allocation8 + $0xf0] sm:$0xff]
    %v391 = vld [vmem:[#allocation8 + $0xf8] sm:$0xff]
    %v392 = vld [vmem:[%s5] sm:$0x3]
    %v394 = vlaneseq
    %v395 = vshrl.u32 %v394, 7
    %v396 = vsub.s32 0, %v395
    %v397 = vrot.slane %v392, %v396
    %v398 = vlaneseq
    %v399 = vshrl.u32 %v398, 7
    %v400 = vsub.s32 1, %v399
    %v401 = vrot.slane %v392, %v400
    %v436 = vunpack.c.l.b16 %v360
    %v437 = vunpack.c.h.b16 %v360
    %v438 = vunpack.c.l.b16 %v361
    %v439 = vunpack.c.h.b16 %v361
    %v440 = vunpack.c.l.b16 %v362
    %v441 = vunpack.c.h.b16 %v362
    %v442 = vunpack.c.l.b16 %v363
    %v443 = vunpack.c.h.b16 %v363
    %v444 = vunpack.c.l.b16 %v364
    %v445 = vunpack.c.h.b16 %v364
    %v446 = vunpack.c.l.b16 %v365
    %v447 = vunpack.c.h.b16 %v365
    %v448 = vunpack.c.l.b16 %v366
    %v449 = vunpack.c.h.b16 %v366
    %v450 = vunpack.c.l.b16 %v367
    %v451 = vunpack.c.h.b16 %v367
    %v452 = vunpack.c.l.b16 %v368
    %v453 = vunpack.c.h.b16 %v368
    %v454 = vunpack.c.l.b16 %v369
    %v455 = vunpack.c.h.b16 %v369
    %v456 = vunpack.c.l.b16 %v370
    %v457 = vunpack.c.h.b16 %v370
    %v458 = vunpack.c.l.b16 %v371
    %v459 = vunpack.c.h.b16 %v371
    %v460 = vunpack.c.l.b16 %v372
    %v461 = vunpack.c.h.b16 %v372
    %v462 = vunpack.c.l.b16 %v373
    %v463 = vunpack.c.h.b16 %v373
    %v464 = vunpack.c.l.b16 %v374
    %v465 = vunpack.c.h.b16 %v374
    %v466 = vunpack.c.l.b16 %v375
    %v467 = vunpack.c.h.b16 %v375
    %v468 = vunpack.c.l.b16 %v376
    %v469 = vunpack.c.h.b16 %v376
    %v470 = vunpack.c.l.b16 %v377
    %v471 = vunpack.c.h.b16 %v377
    %v472 = vunpack.c.l.b16 %v378
    %v473 = vunpack.c.h.b16 %v378
    %v474 = vunpack.c.l.b16 %v379
    %v475 = vunpack.c.h.b16 %v379
    %v476 = vunpack.c.l.b16 %v380
    %v477 = vunpack.c.h.b16 %v380
    %v478 = vunpack.c.l.b16 %v381
    %v479 = vunpack.c.h.b16 %v381
    %v480 = vunpack.c.l.b16 %v382
    %v481 = vunpack.c.h.b16 %v382
    %v482 = vunpack.c.l.b16 %v383
    %v483 = vunpack.c.h.b16 %v383
    %v484 = vunpack.c.l.b16 %v384
    %v485 = vunpack.c.h.b16 %v384
    %v486 = vunpack.c.l.b16 %v385
    %v487 = vunpack.c.h.b16 %v385
    %v488 = vunpack.c.l.b16 %v386
    %v489 = vunpack.c.h.b16 %v386
    %v490 = vunpack.c.l.b16 %v387
    %v491 = vunpack.c.h.b16 %v387
    %v492 = vunpack.c.l.b16 %v388
    %v493 = vunpack.c.h.b16 %v388
    %v494 = vunpack.c.l.b16 %v389
    %v495 = vunpack.c.h.b16 %v389
    %v496 = vunpack.c.l.b16 %v390
    %v497 = vunpack.c.h.b16 %v390
    %v498 = vunpack.c.l.b16 %v391
    %v499 = vunpack.c.h.b16 %v391
    %v500 = vpack.c.b16 %v438, %v436
    %v501 = vpack.c.b16 %v439, %v437
    %v502 = vpack.c.b16 %v442, %v440
    %v503 = vpack.c.b16 %v443, %v441
    %v504 = vpack.c.b16 %v446, %v444
    %v505 = vpack.c.b16 %v447, %v445
    %v506 = vpack.c.b16 %v450, %v448
    %v507 = vpack.c.b16 %v451, %v449
    %v508 = vpack.c.b16 %v454, %v452
    %v509 = vpack.c.b16 %v455, %v453
    %v510 = vpack.c.b16 %v458, %v456
    %v511 = vpack.c.b16 %v459, %v457
    %v512 = vpack.c.b16 %v462, %v460
    %v513 = vpack.c.b16 %v463, %v461
    %v514 = vpack.c.b16 %v466, %v464
    %v515 = vpack.c.b16 %v467, %v465
    %v516 = vpack.c.b16 %v470, %v468
    %v517 = vpack.c.b16 %v471, %v469
    %v518 = vpack.c.b16 %v474, %v472
    %v519 = vpack.c.b16 %v475, %v473
    %v520 = vpack.c.b16 %v478, %v476
    %v521 = vpack.c.b16 %v479, %v477
    %v522 = vpack.c.b16 %v482, %v480
    %v523 = vpack.c.b16 %v483, %v481
    %v524 = vpack.c.b16 %v486, %v484
    %v525 = vpack.c.b16 %v487, %v485
    %v526 = vpack.c.b16 %v490, %v488
    %v527 = vpack.c.b16 %v491, %v489
    %v528 = vpack.c.b16 %v494, %v492
    %v529 = vpack.c.b16 %v495, %v493
    %v530 = vpack.c.b16 %v498, %v496
    %v531 = vpack.c.b16 %v499, %v497
    %564 = vmatprep.subr.bf16.mxu0 %v501
    %565 = vmatpush1.bf16.msra.mxu0 %v500
    %566 = vmatprep.subr.bf16.mxu0 %v503
    %567 = vmatpush1.bf16.msra.mxu0 %v502
    %568 = vmatprep.subr.bf16.mxu0 %v505
    %569 = vmatpush1.bf16.msra.mxu0 %v504
    %570 = vmatprep.subr.bf16.mxu0 %v507
    %571 = vmatpush1.bf16.msra.mxu0 %v506
    %572 = vmatprep.subr.bf16.mxu0 %v509
    %573 = vmatpush1.bf16.msra.mxu0 %v508
    %574 = vmatprep.subr.bf16.mxu0 %v511
    %575 = vmatpush1.bf16.msra.mxu0 %v510
    %576 = vmatprep.subr.bf16.mxu0 %v513
    %577 = vmatpush1.bf16.msra.mxu0 %v512
    %578 = vmatprep.subr.bf16.mxu0 %v515
    %579 = vmatpush1.bf16.msra.mxu0 %v514
    %580 = vmatprep.subr.bf16.mxu0 %v517
    %581 = vmatpush1.bf16.msra.mxu0 %v516
    %582 = vmatprep.subr.bf16.mxu0 %v519
    %583 = vmatpush1.bf16.msra.mxu0 %v518
    %584 = vmatprep.subr.bf16.mxu0 %v521
    %585 = vmatpush1.bf16.msra.mxu0 %v520
    %586 = vmatprep.subr.bf16.mxu0 %v523
    %587 = vmatpush1.bf16.msra.mxu0 %v522
    %588 = vmatprep.subr.bf16.mxu0 %v525
    %589 = vmatpush1.bf16.msra.mxu0 %v524
    %590 = vmatprep.subr.bf16.mxu0 %v527
    %591 = vmatpush1.bf16.msra.mxu0 %v526
    %592 = vmatprep.subr.bf16.mxu0 %v529
    %593 = vmatpush1.bf16.msra.mxu0 %v528
    %594 = vmatprep.subr.bf16.mxu0 %v531
    %595 = vmatpush1.bf16.msra.mxu0 %v530
    %596 = vmatprep.mubr.bf16.mxu0 %v359
    %597 = vmatmul.mubr.bf16.gmra.mrb[0].mxu0 %v358
    %v598 = vpop.f32.mrb[0].mxu0
    %v599 = vadd.f32 %v397, %v598
    %v600 = vpop.f32.mrb[0].mxu0
    %v601 = vadd.f32 %v401, %v600
    %v602 = vpop.f32.mrb[0].mxu0
    %v603 = vpop.f32.mrb[0].mxu0
    %604 = vdwg.mxu0
    %v605 = vld [vmem:[#allocation5] sm:$0xff]
    %v606 = vpack.c.bf16 %v605, %v605
    %v607 = vld [vmem:[#allocation10] sm:$0xff]
    %v608 = vld [vmem:[#allocation10 + $0x8] sm:$0xff]
    %v609 = vld [vmem:[#allocation10 + $0x10] sm:$0xff]
    %v610 = vld [vmem:[#allocation10 + $0x18] sm:$0xff]
    %v611 = vld [vmem:[#allocation10 + $0x20] sm:$0xff]
    %v612 = vld [vmem:[#allocation10 + $0x28] sm:$0xff]
    %v613 = vld [vmem:[#allocation10 + $0x30] sm:$0xff]
    %v614 = vld [vmem:[#allocation10 + $0x38] sm:$0xff]
    %v623 = vunpack.c.l.b16 %v607
    %v624 = vunpack.c.h.b16 %v607
    %v625 = vunpack.c.l.b16 %v608
    %v626 = vunpack.c.h.b16 %v608
    %v627 = vunpack.c.l.b16 %v609
    %v628 = vunpack.c.h.b16 %v609
    %v629 = vunpack.c.l.b16 %v610
    %v630 = vunpack.c.h.b16 %v610
    %v631 = vunpack.c.l.b16 %v611
    %v632 = vunpack.c.h.b16 %v611
    %v633 = vunpack.c.l.b16 %v612
    %v634 = vunpack.c.h.b16 %v612
    %v635 = vunpack.c.l.b16 %v613
    %v636 = vunpack.c.h.b16 %v613
    %v637 = vunpack.c.l.b16 %v614
    %v638 = vunpack.c.h.b16 %v614
    %v639 = vpack.c.b16 %v625, %v623
    %v640 = vpack.c.b16 %v626, %v624
    %v641 = vpack.c.b16 %v629, %v627
    %v642 = vpack.c.b16 %v630, %v628
    %v643 = vpack.c.b16 %v633, %v631
    %v644 = vpack.c.b16 %v634, %v632
    %v645 = vpack.c.b16 %v637, %v635
    %v646 = vpack.c.b16 %v638, %v636
    %vm655 = vcmask 523264
    %v657 = vsel %vm655, %v606, 0
    %659 = vmatprep.subr.bf16.mxu0 %v640
    %660 = vmatpush1.bf16.msra.mxu0 %v639
    %661 = vmatprep.subr.bf16.mxu0 %v642
    %662 = vmatpush1.bf16.msra.mxu0 %v641
    %663 = vmatprep.subr.bf16.mxu0 %v644
    %664 = vmatpush1.bf16.msra.mxu0 %v643
    %665 = vmatprep.subr.bf16.mxu0 %v646
    %666 = vmatpush1.bf16.msra.mxu0 %v645
    %667 = vmatprep.subr.bf16.mxu0 0
    %668 = vmatpush1.bf16.msra.mxu0 0
    %669 = vmatprep.subr.bf16.mxu0 0
    %670 = vmatpush1.bf16.msra.mxu0 0
    %671 = vmatprep.subr.bf16.mxu0 0
    %672 = vmatpush1.bf16.msra.mxu0 0
    %673 = vmatprep.subr.bf16.mxu0 0
    %674 = vmatpush1.bf16.msra.mxu0 0
    %675 = vmatprep.subr.bf16.mxu0 0
    %676 = vmatpush1.bf16.msra.mxu0 0
    %677 = vmatprep.subr.bf16.mxu0 0
    %678 = vmatpush1.bf16.msra.mxu0 0
    %679 = vmatprep.subr.bf16.mxu0 0
    %680 = vmatpush1.bf16.msra.mxu0 0
    %681 = vmatprep.subr.bf16.mxu0 0
    %682 = vmatpush1.bf16.msra.mxu0 0
    %683 = vmatprep.subr.bf16.mxu0 0
    %684 = vmatpush1.bf16.msra.mxu0 0
    %685 = vmatprep.subr.bf16.mxu0 0
    %686 = vmatpush1.bf16.msra.mxu0 0
    %687 = vmatprep.subr.bf16.mxu0 0
    %688 = vmatpush1.bf16.msra.mxu0 0
    %689 = vmatprep.subr.bf16.mxu0 0
    %690 = vmatpush1.bf16.msra.mxu0 0
    %691 = vmatprep.mubr.bf16.mxu0 0
    %692 = vmatmul.mubr.bf16.gmra.mrb[0].mxu0 %v657
    %v693 = vpop.f32.mrb[0].mxu0
    %v694 = vadd.f32 0.0, %v693
    %v695 = vpop.f32.mrb[0].mxu0
    %v696 = vadd.f32 0.0, %v695
    %v697 = vpop.f32.mrb[0].mxu0
    %v698 = vpop.f32.mrb[0].mxu0
    %699 = vdwg.mxu0
    %v700 = vadd.f32 %v599, %v694
    %v701 = vadd.f32 %v601, %v696
    %v702 = vld [vmem:[%s7] sm:$0x3]
    %v704 = vlaneseq
    %v705 = vshrl.u32 %v704, 7
    %v706 = vsub.s32 0, %v705
    %v707 = vrot.slane %v702, %v706
    %v708 = vlaneseq
    %v709 = vshrl.u32 %v708, 7
    %v710 = vsub.s32 1, %v709
    %v711 = vrot.slane %v702, %v710
    %v714 = vadd.f32 %v700, %v707
    %v715 = vadd.f32 %v701, %v711
    %716 = vst [vmem:[#allocation11] sm:$0xff] %v714
    %717 = vst [vmem:[#allocation11 + $0x8] sm:$0xff] %v715
    // Predicated region
    $region54: #{tpu_custom_call.1} parent=1 // pred_check
      _
    $region55: #{tpu_custom_call.1} parent=1 // pred_check_branch
      %719 = sbr.rel (0) target = $region57
    $region56: #{tpu_custom_call.1} parent=1 // pred_region
      %s721 = ssub.s32 256, 256
      %722 = vsyncadd [#allocation4], %s721
      %s724 = sshll.u32 [#allocation11], 4
      %s725 = int_to_ptr.vmem [resolvable:$true] %s724
      %727 = dma.vmem_to_hbm [thread:$0]  %s725, 256, %s8, [#allocation4]
    $region57: #{tpu_custom_call.1} parent=1 // pred_fallthru
      _
    // Predicated region
    $region58: #{tpu_custom_call.1} parent=1 // pred_check
      _
    $region59: #{tpu_custom_call.1} parent=1 // pred_check_branch
      %729 = sbr.rel (0) target = $region61
    $region60: #{tpu_custom_call.1} parent=1 // pred_region
      %730 = dma.done [#allocation4], 256
    $region61: #{tpu_custom_call.1} parent=1 // pred_fallthru
      _
    %731 = vsyncpa [#allocation3], 1
    %732 = vsyncpa [#allocation6], 1
    %733 = vsyncpa [#allocation9], 1
    %734 = vsyncpa [#allocation4], 1

</llo_original>
